<compile_context>
chip_gen: v7x
topology: tpu7x:2x2x1
jax: 0.10.0
libtpu: 0.0.40
codegen_flags: <defaults>
</compile_context>

<pallas_src>
import functools

import jax
import jax.numpy as jnp
from jax import lax
from jax.experimental import pallas as pl
from jax.experimental.pallas import tpu as pltpu

_NEG_INF = -1e30
_VMEM_LIMIT = 48 * 1024 * 1024   # scoped-VMEM override (fits v5e/v6e/v7x)
_VMEM_BUDGET = 40 * 1024 * 1024  # what our own tile plan may use (headroom)


def _round_up(x: int, m: int) -> int:
    return (x + m - 1) // m * m


# ---------------------------------------------------------------------------
# Linear layers (matmul + bias), bf16 MXU inputs, f32 accumulation.
# ---------------------------------------------------------------------------
def _linear_kernel_single(x_ref, w_ref, b_ref, o_ref):
    acc = jnp.dot(x_ref[...], w_ref[...], preferred_element_type=jnp.float32)
    o_ref[...] = (acc + b_ref[...]).astype(o_ref.dtype)


def _linear_kernel_acc(x_ref, w_ref, b_ref, o_ref, acc_ref):
    @pl.when(pl.program_id(2) == 0)
    def _init():
        acc_ref[...] = jnp.zeros_like(acc_ref)

    acc_ref[...] += jnp.dot(x_ref[...], w_ref[...],
                            preferred_element_type=jnp.float32)

    @pl.when(pl.program_id(2) == pl.num_programs(2) - 1)
    def _store():
        o_ref[...] = (acc_ref[...] + b_ref[...]).astype(o_ref.dtype)


def pallas_linear(x2d, w_t, bias=None, *, tm=512, tn=1024, tk=1024,
                  compute_dtype=jnp.bfloat16, out_dtype=None):
    """(M, K) @ (K, N) (+ bias) -> (M, N).

    Operands are cast to `compute_dtype` (bf16) for the MXU; accumulation is
    f32.  When the full (K, N) weight fits the VMEM budget the grid runs over
    M only (weight read from HBM exactly once); otherwise a 3-axis tiled grid
    with an f32 VMEM accumulator is used.
    """
    M, K = x2d.shape
    Kw, N = w_t.shape
    assert K == Kw
    if out_dtype is None:
        out_dtype = x2d.dtype
    in_item = jnp.dtype(compute_dtype).itemsize
    out_item = jnp.dtype(out_dtype).itemsize

    x2d = x2d.astype(compute_dtype)
    w_t = w_t.astype(compute_dtype)

    tm = min(tm, _round_up(M, 8))
    full_n, full_k = _round_up(N, 128), _round_up(K, 128)
    resident_bytes = (2 * full_k * full_n * in_item      # weight (dbl-buffered)
                      + 2 * tm * full_k * in_item        # x tiles
                      + 2 * tm * full_n * out_item       # out tiles
                      + 2 * full_n * 4)                  # bias
    if resident_bytes <= _VMEM_BUDGET:
        tn, tk = full_n, full_k                          # weight-resident
    else:
        tn, tk = min(tn, full_n), min(tk, full_k)

    Mp, Np, Kp = _round_up(M, tm), _round_up(N, tn), _round_up(K, tk)
    if (Mp, Kp) != (M, K):
        x2d = jnp.pad(x2d, ((0, Mp - M), (0, Kp - K)))
    if (Kp, Np) != (K, N):
        w_t = jnp.pad(w_t, ((0, Kp - K), (0, Np - N)))
    if bias is None:
        b2d = jnp.zeros((1, Np), jnp.float32)
    else:
        b2d = bias.reshape(1, N).astype(jnp.float32)
        if Np != N:
            b2d = jnp.pad(b2d, ((0, 0), (0, Np - N)))

    grid = (Mp // tm, Np // tn, Kp // tk)
    single_k = grid[2] == 1

    x_spec = pl.BlockSpec((tm, tk), lambda i, j, k: (i, k))
    w_spec = pl.BlockSpec((tk, tn), lambda i, j, k: (k, j))
    b_spec = pl.BlockSpec((1, tn), lambda i, j, k: (0, j))
    o_spec = pl.BlockSpec((tm, tn), lambda i, j, k: (i, j))

    cost = pl.CostEstimate(
        flops=2 * Mp * Np * Kp,
        transcendentals=0,
        bytes_accessed=(in_item * (Mp * Kp * (Np // tn) + Kp * Np * (Mp // tm))
                        + out_item * Mp * Np + 4 * Np),
    )
    out = pl.pallas_call(
        _linear_kernel_single if single_k else _linear_kernel_acc,
        out_shape=jax.ShapeDtypeStruct((Mp, Np), out_dtype),
        grid=grid,
        in_specs=[x_spec, w_spec, b_spec],
        out_specs=o_spec,
        scratch_shapes=[] if single_k else [pltpu.VMEM((tm, tn), jnp.float32)],
        compiler_params=pltpu.CompilerParams(
            dimension_semantics=("parallel", "parallel", "arbitrary"),
            vmem_limit_bytes=_VMEM_LIMIT),
        cost_estimate=cost,
    )(x2d, w_t, b2d)

    if (Mp, Np) != (M, N):
        out = out[:M, :N]
    return out


# ---------------------------------------------------------------------------
# Flash-style attention: online softmax, KV streamed over an arbitrary axis.
# ---------------------------------------------------------------------------
def _flash_attn_kernel(q_ref, k_ref, v_ref, o_ref, m_sc, l_sc, acc_sc, *,
                       scale, kv_len, kv_block, kv_axis, masked):
    kv_i = pl.program_id(kv_axis)

    @pl.when(kv_i == 0)
    def _init():
        m_sc[...] = jnp.full_like(m_sc, -jnp.inf)
        l_sc[...] = jnp.zeros_like(l_sc)
        acc_sc[...] = jnp.zeros_like(acc_sc)

    # Softmax scale folded into q (tq*D multiplies, not tq*tkv).
    q = q_ref[...] * scale
    # q @ k^T contracting on the last axes of both operands.
    # TODO(synk): verify in the Mosaic dump that this does not emit an XLU
    # transpose of the (tkv, D) tile; if it does, feed K pre-transposed.
    s = lax.dot_general(q, k_ref[...], (((1,), (1,)), ((), ())),
                        preferred_element_type=jnp.float32)   # (tq, tkv) f32

    if masked:  # static python bool: only emitted when the seq dim was padded
        # TODO(synk): could be gated to the final kv tile via a split loop.
        kv_pos = kv_i * kv_block + lax.broadcasted_iota(jnp.int32, s.shape, 1)
        s = jnp.where(kv_pos < kv_len, s, _NEG_INF)

    m_prev = m_sc[...]
    m_new = jnp.maximum(m_prev, jnp.max(s, axis=-1, keepdims=True))
    alpha = jnp.exp(m_prev - m_new)
    p = jnp.exp(s - m_new)
    l_sc[...] = alpha * l_sc[...] + jnp.sum(p, axis=-1, keepdims=True)
    acc_sc[...] = alpha * acc_sc[...] + jnp.dot(
        p.astype(v_ref.dtype), v_ref[...], preferred_element_type=jnp.float32)
    m_sc[...] = m_new

    @pl.when(kv_i == pl.num_programs(kv_axis) - 1)
    def _store():
        # Exact divide: runs once per q tile on a (tq, 1) vector, so the
        # approx-reciprocal saving is not worth the accuracy loss.
        o_ref[...] = (acc_sc[...] / l_sc[...]).astype(o_ref.dtype)


def _flash_tiles(N, tq, tkv):
    tq = min(tq, _round_up(N, 8))
    tkv = min(tkv, _round_up(N, 8))
    Np = _round_up(N, max(tq, tkv))
    assert Np % tq == 0 and Np % tkv == 0
    return tq, tkv, Np


def pallas_flash_attention_fused(qkv, num_heads, scale, *, tq=512, tkv=512):
    """qkv: (B, N, 3C) with channel layout [q | k | v], each head-major.

    Heads (and the q/k/v split) are indexed directly through BlockSpec channel
    offsets (requires head_dim % 128 == 0), and the output is written straight
    in (B, N, C) layout — no activation transposes, lane-dense stores.
    """
    B, N, C3 = qkv.shape
    C = C3 // 3
    H = num_heads
    D = C // H
    assert D % 128 == 0
    tq, tkv, Np = _flash_tiles(N, tq, tkv)
    if Np != N:
        qkv = jnp.pad(qkv, ((0, 0), (0, Np - N), (0, 0)))

    grid = (B, H, Np // tq, Np // tkv)
    q_spec = pl.BlockSpec((None, tq, D), lambda b, h, qi, ki: (b, qi, h))
    k_spec = pl.BlockSpec((None, tkv, D), lambda b, h, qi, ki: (b, ki, H + h))
    v_spec = pl.BlockSpec((None, tkv, D), lambda b, h, qi, ki: (b, ki, 2 * H + h))
    o_spec = pl.BlockSpec((None, tq, D), lambda b, h, qi, ki: (b, qi, h))

    kernel = functools.partial(_flash_attn_kernel, scale=scale, kv_len=N,
                               kv_block=tkv, kv_axis=3, masked=(Np != N))
    item = jnp.dtype(qkv.dtype).itemsize
    cost = pl.CostEstimate(
        flops=4 * B * H * Np * Np * D,
        transcendentals=B * H * Np * Np,
        # q + out once, K/V re-read Np/tq times.
        bytes_accessed=item * B * H * Np * D * (2 + 2 * (Np // tq)),
    )
    out = pl.pallas_call(
        kernel,
        out_shape=jax.ShapeDtypeStruct((B, Np, C), qkv.dtype),
        grid=grid,
        in_specs=[q_spec, k_spec, v_spec],
        out_specs=o_spec,
        scratch_shapes=[pltpu.VMEM((tq, 1), jnp.float32),   # running max m
                        pltpu.VMEM((tq, 1), jnp.float32),   # running sum l
                        pltpu.VMEM((tq, D), jnp.float32)],  # output accumulator
        compiler_params=pltpu.CompilerParams(
            dimension_semantics=("parallel", "parallel", "parallel", "arbitrary"),
            vmem_limit_bytes=_VMEM_LIMIT),
        cost_estimate=cost,
    )(qkv, qkv, qkv)
    if Np != N:
        out = out[:, :N, :]
    return out  # (B, N, C)


def pallas_flash_attention(q, k, v, scale, *, tq=512, tkv=512):
    """q, k, v: (B*H, N, D) -> softmax(q k^T * scale) v, flash-style."""
    BH, N, D = q.shape
    tq, tkv, Np = _flash_tiles(N, tq, tkv)
    if Np != N:
        pad = ((0, 0), (0, Np - N), (0, 0))
        q, k, v = jnp.pad(q, pad), jnp.pad(k, pad), jnp.pad(v, pad)

    grid = (BH, Np // tq, Np // tkv)
    q_spec = pl.BlockSpec((None, tq, D), lambda bh, qi, ki: (bh, qi, 0))
    kv_spec = pl.BlockSpec((None, tkv, D), lambda bh, qi, ki: (bh, ki, 0))
    o_spec = pl.BlockSpec((None, tq, D), lambda bh, qi, ki: (bh, qi, 0))

    kernel = functools.partial(_flash_attn_kernel, scale=scale, kv_len=N,
                               kv_block=tkv, kv_axis=2, masked=(Np != N))
    item = jnp.dtype(q.dtype).itemsize
    cost = pl.CostEstimate(
        flops=4 * BH * Np * Np * D,
        transcendentals=BH * Np * Np,
        bytes_accessed=item * BH * Np * D * (2 + 2 * (Np // tq)),
    )
    out = pl.pallas_call(
        kernel,
        out_shape=jax.ShapeDtypeStruct((BH, Np, D), q.dtype),
        grid=grid,
        in_specs=[q_spec, kv_spec, kv_spec],
        out_specs=o_spec,
        scratch_shapes=[pltpu.VMEM((tq, 1), jnp.float32),
                        pltpu.VMEM((tq, 1), jnp.float32),
                        pltpu.VMEM((tq, D), jnp.float32)],
        compiler_params=pltpu.CompilerParams(
            dimension_semantics=("parallel", "parallel", "arbitrary"),
            vmem_limit_bytes=_VMEM_LIMIT),
        cost_estimate=cost,
    )(q, k, v)
    if Np != N:
        out = out[:, :N, :]
    return out


# ---------------------------------------------------------------------------
# Full forward pass (mirrors Attention.forward with use_sdpa=True, eval mode)
# ---------------------------------------------------------------------------
def attention_forward(x, params, num_heads, *, compute_dtype=jnp.bfloat16):
    B, N, C = x.shape
    D = C // num_heads
    scale = D ** (-0.5)

    # qkv = Linear(C, 3C, bias=False)(x); kept in bf16 for the attention MXU.
    x2d = x.reshape(B * N, C)
    qkv2d = pallas_linear(x2d, params["w_qkv"].T,
                          compute_dtype=compute_dtype, out_dtype=compute_dtype)

    if D % 128 == 0:
        # q/k/v and heads indexed straight out of the (B, N, 3C) qkv buffer by
        # the flash kernel's BlockSpecs; output lands in (B, N, C) layout.
        o2d = pallas_flash_attention_fused(
            qkv2d.reshape(B, N, 3 * C), num_heads, scale).reshape(B * N, C)
    else:
        # TODO(synk): head_dim < 128 violates the (8,128) last-dim block rule
        # for per-head channel slices, so the qkv split / head merge transposes
        # are left to XLA on this path.
        qkv = qkv2d.reshape(B, N, 3, num_heads, D).transpose(2, 0, 3, 1, 4)
        q = qkv[0].reshape(B * num_heads, N, D)
        k = qkv[1].reshape(B * num_heads, N, D)
        v = qkv[2].reshape(B * num_heads, N, D)
        o = pallas_flash_attention(q, k, v, scale)        # (B*H, N, D)
        o2d = (o.reshape(B, num_heads, N, D)
                 .transpose(0, 2, 1, 3).reshape(B * N, C))

    # proj = Linear(C, C) with bias; attn_drop / proj_drop are identity (p=0).
    out = pallas_linear(o2d, params["w_proj"].T, params["b_proj"],
                        compute_dtype=compute_dtype, out_dtype=x.dtype)
    return out.reshape(B, N, C), None


# ---------------------------------------------------------------------------
# Pure-JAX reference for correctness
# ---------------------------------------------------------------------------
def attention_reference(x, params, num_heads):
    B, N, C = x.shape
    D = C // num_heads
    scale = D ** (-0.5)
    qkv = x @ params["w_qkv"].T
    qkv = qkv.reshape(B, N, 3, num_heads, D).transpose(2, 0, 3, 1, 4)
    q, k, v = qkv[0], qkv[1], qkv[2]
    s = jnp.einsum("bhnd,bhmd->bhnm", q, k) * scale
    p = jax.nn.softmax(s, axis=-1)
    o = jnp.einsum("bhnm,bhmd->bhnd", p, v)
    o = o.transpose(0, 2, 1, 3).reshape(B, N, C)
    return o @ params["w_proj"].T + params["b_proj"]


# ---------------------------------------------------------------------------
if __name__ == "__main__":
    def run_case(name, B, N, C, num_heads):
        key = jax.random.PRNGKey(0)
        kx, kq, kp, kb = jax.random.split(key, 4)
        x = jax.random.normal(kx, (B, N, C), dtype=jnp.float32)
        params = {
            # torch.nn.Linear(dim, 3*dim, bias=False): weight shape (3C, C)
            "w_qkv": jax.random.normal(kq, (3 * C, C), dtype=jnp.float32) * 0.05,
            # torch.nn.Linear(dim, dim): weight (C, C), bias (C,)
            "w_proj": jax.random.normal(kp, (C, C), dtype=jnp.float32) * 0.05,
            "b_proj": jax.random.normal(kb, (C,), dtype=jnp.float32) * 0.01,
        }
        fwd = jax.jit(functools.partial(attention_forward, num_heads=num_heads))
        out, attn = fwd(x, params)
        out = jax.block_until_ready(out)
        ref = attention_reference(x, params, num_heads)
        assert out.shape == (B, N, C), name
        assert attn is None, name
        # bf16 MXU inputs (f32 accumulation) => looser tolerance than pure f32.
        assert jnp.allclose(out, ref, atol=3e-2, rtol=3e-2), f"mismatch: {name}"

    # Small-head path (head_dim=4): XLA handles head split/merge; seq padded ->
    # exercises the masked flash branch.
    run_case("fallback-layout", B=2, N=10, C=32, num_heads=8)
    # head_dim=128 path: heads indexed straight out of the qkv buffer; seq
    # padded -> exercises the masked fused branch.
    run_case("fused-layout", B=1, N=12, C=256, num_heads=2)

    print("KERNEL_OK")
</pallas_src>

<mosaic_0001>
module attributes {stable_mosaic.version = 11 : i64} {
  func.func @_linear_kernel_single(%arg0: i32, %arg1: i32, %arg2: i32, %arg3: memref<24x128xbf16, #tpu.memory_space<vmem>>, %arg4: memref<128x128xbf16, #tpu.memory_space<vmem>>, %arg5: memref<1x128xf32, #tpu.memory_space<vmem>>, %arg6: memref<24x128xbf16, #tpu.memory_space<vmem>>) attributes {dimension_semantics = [#tpu.dimension_semantics<parallel>, #tpu.dimension_semantics<parallel>, #tpu.dimension_semantics<arbitrary>], iteration_bounds = array<i64: 1, 1, 1>, scalar_prefetch = 0 : i64, scratch_operands = 0 : i64, tpu.core_type = #tpu.core_type<tc>, window_params = [{transform_indices = @transform_0, window_bounds = array<i64: 24, 128>}, {transform_indices = @transform_1, window_bounds = array<i64: 128, 128>}, {transform_indices = @transform_2, window_bounds = array<i64: 1, 128>}, {transform_indices = @transform_3, window_bounds = array<i64: 24, 128>}]} {
    %c0 = arith.constant 0 : index
    %c0_0 = arith.constant 0 : index
    %0 = vector.load %arg3[%c0, %c0_0] : memref<24x128xbf16, #tpu.memory_space<vmem>>, vector<24x128xbf16>
    %c0_1 = arith.constant 0 : index
    %c0_2 = arith.constant 0 : index
    %1 = vector.load %arg4[%c0_1, %c0_2] : memref<128x128xbf16, #tpu.memory_space<vmem>>, vector<128x128xbf16>
    %cst = arith.constant dense<0.000000e+00> : vector<24x128xf32>
    %2 = tpu.matmul %0, %1, %cst {dimension_numbers = #tpu.dot_dimension_numbers<[1], [0], [0], [1], [0, 0, 1, 1], [], []>} : vector<24x128xbf16>, vector<128x128xbf16>, vector<24x128xf32> -> vector<24x128xf32>
    %c0_3 = arith.constant 0 : index
    %c0_4 = arith.constant 0 : index
    %3 = vector.load %arg5[%c0_3, %c0_4] : memref<1x128xf32, #tpu.memory_space<vmem>>, vector<1x128xf32>
    %4 = vector.broadcast %3 : vector<1x128xf32> to vector<24x128xf32>
    %5 = arith.addf %2, %4 : vector<24x128xf32>
    %6 = arith.truncf %5 : vector<24x128xf32> to vector<24x128xbf16>
    %c0_5 = arith.constant 0 : index
    %c0_6 = arith.constant 0 : index
    %7 = vector.load %arg6[%c0_5, %c0_6] : memref<24x128xbf16, #tpu.memory_space<vmem>>, vector<24x128xbf16>
    tpu.vector_store %arg6[%c0_5, %c0_6], %6 {strides = array<i32>} : memref<24x128xbf16, #tpu.memory_space<vmem>>, vector<24x128xbf16>,
    return
  }
  func.func @transform_0(%arg0: i32, %arg1: i32, %arg2: i32) -> (i32, i32) {
    %c0_i32 = arith.constant 0 : i32
    return %arg0, %arg2 : i32, i32
  }
  func.func @transform_1(%arg0: i32, %arg1: i32, %arg2: i32) -> (i32, i32) {
    %c0_i32 = arith.constant 0 : i32
    return %arg2, %arg1 : i32, i32
  }
  func.func @transform_2(%arg0: i32, %arg1: i32, %arg2: i32) -> (i32, i32) {
    %c0_i32 = arith.constant 0 : i32
    %c0_i32_0 = arith.constant 0 : i32
    return %c0_i32, %arg1 : i32, i32
  }
  func.func @transform_3(%arg0: i32, %arg1: i32, %arg2: i32) -> (i32, i32) {
    %c0_i32 = arith.constant 0 : i32
    return %arg0, %arg1 : i32, i32
  }
}

module attributes {stable_mosaic.version = 11 : i64} {
  func.func @_flash_attn_kernel(%arg0: i32, %arg1: i32, %arg2: i32, %arg3: memref<1x16x4xbf16, #tpu.memory_space<vmem>>, %arg4: memref<1x16x4xbf16, #tpu.memory_space<vmem>>, %arg5: memref<1x16x4xbf16, #tpu.memory_space<vmem>>, %arg6: memref<1x16x4xbf16, #tpu.memory_space<vmem>>, %arg7: memref<16x1xf32, #tpu.memory_space<vmem>>, %arg8: memref<16x1xf32, #tpu.memory_space<vmem>>, %arg9: memref<16x4xf32, #tpu.memory_space<vmem>>) attributes {dimension_semantics = [#tpu.dimension_semantics<parallel>, #tpu.dimension_semantics<parallel>, #tpu.dimension_semantics<arbitrary>], iteration_bounds = array<i64: 16, 1, 1>, scalar_prefetch = 0 : i64, scratch_operands = 3 : i64, tpu.core_type = #tpu.core_type<tc>, window_params = [{transform_indices = @transform_0, window_bounds = array<i64: 1, 16, 4>}, {transform_indices = @transform_1, window_bounds = array<i64: 1, 16, 4>}, {transform_indices = @transform_2, window_bounds = array<i64: 1, 16, 4>}, {transform_indices = @transform_3, window_bounds = array<i64: 1, 16, 4>}]} {
    %c0_i32 = arith.constant 0 : i32
    %0 = arith.cmpi eq, %arg2, %c0_i32 : i32
    %1 = arith.extui %0 : i1 to i32
    %c0_i32_0 = arith.constant 0 : i32
    %2 = arith.cmpi ne, %1, %c0_i32_0 : i32
    scf.if %2 {
      %cst_28 = arith.constant 0xFF800000 : f32
      %46 = vector.broadcast %cst_28 : f32 to vector<16x1xf32>
      %c0_29 = arith.constant 0 : index
      %c0_30 = arith.constant 0 : index
      %47 = vector.load %arg7[%c0_29, %c0_30] : memref<16x1xf32, #tpu.memory_space<vmem>>, vector<16x1xf32>
      tpu.vector_store %arg7[%c0_29, %c0_30], %46 {strides = array<i32>} : memref<16x1xf32, #tpu.memory_space<vmem>>, vector<16x1xf32>,
      %cst_31 = arith.constant 0.000000e+00 : f32
      %48 = vector.broadcast %cst_31 : f32 to vector<16x1xf32>
      %c0_32 = arith.constant 0 : index
      %c0_33 = arith.constant 0 : index
      %49 = vector.load %arg8[%c0_32, %c0_33] : memref<16x1xf32, #tpu.memory_space<vmem>>, vector<16x1xf32>
      tpu.vector_store %arg8[%c0_32, %c0_33], %48 {strides = array<i32>} : memref<16x1xf32, #tpu.memory_space<vmem>>, vector<16x1xf32>,
      %cst_34 = arith.constant 0.000000e+00 : f32
      %50 = vector.broadcast %cst_34 : f32 to vector<16x4xf32>
      %c0_35 = arith.constant 0 : index
      %c0_36 = arith.constant 0 : index
      %51 = vector.load %arg9[%c0_35, %c0_36] : memref<16x4xf32, #tpu.memory_space<vmem>>, vector<16x4xf32>
      tpu.vector_store %arg9[%c0_35, %c0_36], %50 {strides = array<i32>} : memref<16x4xf32, #tpu.memory_space<vmem>>, vector<16x4xf32>,
    } else {
    }
    %c0 = arith.constant 0 : index
    %c0_1 = arith.constant 0 : index
    %c0_2 = arith.constant 0 : index
    %3 = vector.load %arg3[%c0, %c0_1, %c0_2] : memref<1x16x4xbf16, #tpu.memory_space<vmem>>, vector<1x16x4xbf16>
    %4 = vector.shape_cast %3 : vector<1x16x4xbf16> to vector<16x4xbf16>
    %cst = arith.constant 5.000000e-01 : bf16
    %5 = vector.broadcast %cst : bf16 to vector<16x4xbf16>
    %6 = arith.mulf %4, %5 : vector<16x4xbf16>
    %c0_3 = arith.constant 0 : index
    %c0_4 = arith.constant 0 : index
    %c0_5 = arith.constant 0 : index
    %7 = vector.load %arg4[%c0_3, %c0_4, %c0_5] : memref<1x16x4xbf16, #tpu.memory_space<vmem>>, vector<1x16x4xbf16>
    %8 = vector.shape_cast %7 : vector<1x16x4xbf16> to vector<16x4xbf16>
    %cst_6 = arith.constant dense<0.000000e+00> : vector<16x16xf32>
    %9 = tpu.matmul %6, %8, %cst_6 {dimension_numbers = #tpu.dot_dimension_numbers<[1], [1], [0], [0], [0, 0, 1, 0], [], []>} : vector<16x4xbf16>, vector<16x4xbf16>, vector<16x16xf32> -> vector<16x16xf32>
    %c16_i32 = arith.constant 16 : i32
    %10 = arith.muli %arg2, %c16_i32 : i32
    %11 = tpu.iota {dimensions = array<i32: 1>} : vector<16x16xi32>
    %12 = vector.broadcast %10 : i32 to vector<16x16xi32>
    %13 = arith.addi %12, %11 : vector<16x16xi32>
    %c10_i32 = arith.constant 10 : i32
    %14 = vector.broadcast %c10_i32 : i32 to vector<16x16xi32>
    %15 = arith.cmpi slt, %13, %14 : vector<16x16xi32>
    %cst_7 = arith.constant -1.000000e+30 : f32
    %16 = vector.broadcast %cst_7 : f32 to vector<16x16xf32>
    %17 = arith.select %15, %9, %16 : vector<16x16xi1>, vector<16x16xf32>
    %c0_8 = arith.constant 0 : index
    %c0_9 = arith.constant 0 : index
    %18 = vector.load %arg7[%c0_8, %c0_9] : memref<16x1xf32, #tpu.memory_space<vmem>>, vector<16x1xf32>
    %cst_10 = arith.constant dense<0xFF800000> : vector<16xf32>
    %19 = vector.multi_reduction <maximumf>, %17, %cst_10 [1] : vector<16x16xf32> to vector<16xf32>
    %20 = vector.shape_cast %19 : vector<16xf32> to vector<16x1xf32>
    %21 = arith.maximumf %18, %20 : vector<16x1xf32>
    %22 = arith.subf %18, %21 : vector<16x1xf32>
    %23 = math.exp %22 : vector<16x1xf32>
    %24 = vector.broadcast %21 : vector<16x1xf32> to vector<16x16xf32>
    %25 = arith.subf %17, %24 : vector<16x16xf32>
    %26 = math.exp %25 : vector<16x16xf32>
    %c0_11 = arith.constant 0 : index
    %c0_12 = arith.constant 0 : index
    %27 = vector.load %arg8[%c0_11, %c0_12] : memref<16x1xf32, #tpu.memory_space<vmem>>, vector<16x1xf32>
    %28 = arith.mulf %23, %27 : vector<16x1xf32>
    %cst_13 = arith.constant dense<0.000000e+00> : vector<16xf32>
    %29 = vector.multi_reduction <add>, %26, %cst_13 [1] : vector<16x16xf32> to vector<16xf32>
    %30 = vector.shape_cast %29 : vector<16xf32> to vector<16x1xf32>
    %31 = arith.addf %28, %30 : vector<16x1xf32>
    %c0_14 = arith.constant 0 : index
    %c0_15 = arith.constant 0 : index
    %32 = vector.load %arg8[%c0_14, %c0_15] : memref<16x1xf32, #tpu.memory_space<vmem>>, vector<16x1xf32>
    tpu.vector_store %arg8[%c0_14, %c0_15], %31 {strides = array<i32>} : memref<16x1xf32, #tpu.memory_space<vmem>>, vector<16x1xf32>,
    %c0_16 = arith.constant 0 : index
    %c0_17 = arith.constant 0 : index
    %33 = vector.load %arg9[%c0_16, %c0_17] : memref<16x4xf32, #tpu.memory_space<vmem>>, vector<16x4xf32>
    %34 = vector.broadcast %23 : vector<16x1xf32> to vector<16x4xf32>
    %35 = arith.mulf %34, %33 : vector<16x4xf32>
    %36 = arith.truncf %26 : vector<16x16xf32> to vector<16x16xbf16>
    %c0_18 = arith.constant 0 : index
    %c0_19 = arith.constant 0 : index
    %c0_20 = arith.constant 0 : index
    %37 = vector.load %arg5[%c0_18, %c0_19, %c0_20] : memref<1x16x4xbf16, #tpu.memory_space<vmem>>, vector<1x16x4xbf16>
    %38 = vector.shape_cast %37 : vector<1x16x4xbf16> to vector<16x4xbf16>
    %cst_21 = arith.constant dense<0.000000e+00> : vector<16x4xf32>
    %39 = tpu.matmul %36, %38, %cst_21 {dimension_numbers = #tpu.dot_dimension_numbers<[1], [0], [0], [1], [0, 0, 1, 1], [], []>} : vector<16x16xbf16>, vector<16x4xbf16>, vector<16x4xf32> -> vector<16x4xf32>
    %40 = arith.addf %35, %39 : vector<16x4xf32>
    %c0_22 = arith.constant 0 : index
    %c0_23 = arith.constant 0 : index
    %41 = vector.load %arg9[%c0_22, %c0_23] : memref<16x4xf32, #tpu.memory_space<vmem>>, vector<16x4xf32>
    tpu.vector_store %arg9[%c0_22, %c0_23], %40 {strides = array<i32>} : memref<16x4xf32, #tpu.memory_space<vmem>>, vector<16x4xf32>,
    %c0_24 = arith.constant 0 : index
    %c0_25 = arith.constant 0 : index
    %42 = vector.load %arg7[%c0_24, %c0_25] : memref<16x1xf32, #tpu.memory_space<vmem>>, vector<16x1xf32>
    tpu.vector_store %arg7[%c0_24, %c0_25], %21 {strides = array<i32>} : memref<16x1xf32, #tpu.memory_space<vmem>>, vector<16x1xf32>,
    %c0_i32_26 = arith.constant 0 : i32
    %43 = arith.cmpi eq, %arg2, %c0_i32_26 : i32
    %44 = arith.extui %43 : i1 to i32
    %c0_i32_27 = arith.constant 0 : i32
    %45 = arith.cmpi ne, %44, %c0_i32_27 : i32
    scf.if %45 {
      %c0_28 = arith.constant 0 : index
      %c0_29 = arith.constant 0 : index
      %46 = vector.load %arg9[%c0_28, %c0_29] : memref<16x4xf32, #tpu.memory_space<vmem>>, vector<16x4xf32>
      %c0_30 = arith.constant 0 : index
      %c0_31 = arith.constant 0 : index
      %47 = vector.load %arg8[%c0_30, %c0_31] : memref<16x1xf32, #tpu.memory_space<vmem>>, vector<16x1xf32>
      %48 = vector.broadcast %47 : vector<16x1xf32> to vector<16x4xf32>
      %49 = arith.divf %46, %48 : vector<16x4xf32>
      %50 = arith.truncf %49 : vector<16x4xf32> to vector<16x4xbf16>
      %c0_32 = arith.constant 0 : index
      %c0_33 = arith.constant 0 : index
      %c0_34 = arith.constant 0 : index
      %51 = vector.load %arg6[%c0_32, %c0_33, %c0_34] : memref<1x16x4xbf16, #tpu.memory_space<vmem>>, vector<1x16x4xbf16>
      %52 = vector.shape_cast %51 : vector<1x16x4xbf16> to vector<16x4xbf16>
      %53 = vector.shape_cast %50 : vector<16x4xbf16> to vector<1x16x4xbf16>
      tpu.vector_store %arg6[%c0_32, %c0_33, %c0_34], %53 {strides = array<i32>} : memref<1x16x4xbf16, #tpu.memory_space<vmem>>, vector<1x16x4xbf16>,
    } else {
    }
    return
  }
  func.func @transform_0(%arg0: i32, %arg1: i32, %arg2: i32) -> (i32, i32, i32) {
    %c0_i32 = arith.constant 0 : i32
    %c0_i32_0 = arith.constant 0 : i32
    return %arg0, %arg1, %c0_i32 : i32, i32, i32
  }
  func.func @transform_1(%arg0: i32, %arg1: i32, %arg2: i32) -> (i32, i32, i32) {
    %c0_i32 = arith.constant 0 : i32
    %c0_i32_0 = arith.constant 0 : i32
    return %arg0, %arg2, %c0_i32 : i32, i32, i32
  }
  func.func @transform_2(%arg0: i32, %arg1: i32, %arg2: i32) -> (i32, i32, i32) {
    %c0_i32 = arith.constant 0 : i32
    %c0_i32_0 = arith.constant 0 : i32
    return %arg0, %arg2, %c0_i32 : i32, i32, i32
  }
  func.func @transform_3(%arg0: i32, %arg1: i32, %arg2: i32) -> (i32, i32, i32) {
    %c0_i32 = arith.constant 0 : i32
    %c0_i32_0 = arith.constant 0 : i32
    return %arg0, %arg1, %c0_i32 : i32, i32, i32
  }
}

module attributes {stable_mosaic.version = 11 : i64} {
  func.func @_linear_kernel_single(%arg0: i32, %arg1: i32, %arg2: i32, %arg3: memref<24x128xbf16, #tpu.memory_space<vmem>>, %arg4: memref<128x128xbf16, #tpu.memory_space<vmem>>, %arg5: memref<1x128xf32, #tpu.memory_space<vmem>>, %arg6: memref<24x128xf32, #tpu.memory_space<vmem>>) attributes {dimension_semantics = [#tpu.dimension_semantics<parallel>, #tpu.dimension_semantics<parallel>, #tpu.dimension_semantics<arbitrary>], iteration_bounds = array<i64: 1, 1, 1>, scalar_prefetch = 0 : i64, scratch_operands = 0 : i64, tpu.core_type = #tpu.core_type<tc>, window_params = [{transform_indices = @transform_0, window_bounds = array<i64: 24, 128>}, {transform_indices = @transform_1, window_bounds = array<i64: 128, 128>}, {transform_indices = @transform_2, window_bounds = array<i64: 1, 128>}, {transform_indices = @transform_3, window_bounds = array<i64: 24, 128>}]} {
    %c0 = arith.constant 0 : index
    %c0_0 = arith.constant 0 : index
    %0 = vector.load %arg3[%c0, %c0_0] : memref<24x128xbf16, #tpu.memory_space<vmem>>, vector<24x128xbf16>
    %c0_1 = arith.constant 0 : index
    %c0_2 = arith.constant 0 : index
    %1 = vector.load %arg4[%c0_1, %c0_2] : memref<128x128xbf16, #tpu.memory_space<vmem>>, vector<128x128xbf16>
    %cst = arith.constant dense<0.000000e+00> : vector<24x128xf32>
    %2 = tpu.matmul %0, %1, %cst {dimension_numbers = #tpu.dot_dimension_numbers<[1], [0], [0], [1], [0, 0, 1, 1], [], []>} : vector<24x128xbf16>, vector<128x128xbf16>, vector<24x128xf32> -> vector<24x128xf32>
    %c0_3 = arith.constant 0 : index
    %c0_4 = arith.constant 0 : index
    %3 = vector.load %arg5[%c0_3, %c0_4] : memref<1x128xf32, #tpu.memory_space<vmem>>, vector<1x128xf32>
    %4 = vector.broadcast %3 : vector<1x128xf32> to vector<24x128xf32>
    %5 = arith.addf %2, %4 : vector<24x128xf32>
    %c0_5 = arith.constant 0 : index
    %c0_6 = arith.constant 0 : index
    %6 = vector.load %arg6[%c0_5, %c0_6] : memref<24x128xf32, #tpu.memory_space<vmem>>, vector<24x128xf32>
    tpu.vector_store %arg6[%c0_5, %c0_6], %5 {strides = array<i32>} : memref<24x128xf32, #tpu.memory_space<vmem>>, vector<24x128xf32>,
    return
  }
  func.func @transform_0(%arg0: i32, %arg1: i32, %arg2: i32) -> (i32, i32) {
    %c0_i32 = arith.constant 0 : i32
    return %arg0, %arg2 : i32, i32
  }
  func.func @transform_1(%arg0: i32, %arg1: i32, %arg2: i32) -> (i32, i32) {
    %c0_i32 = arith.constant 0 : i32
    return %arg2, %arg1 : i32, i32
  }
  func.func @transform_2(%arg0: i32, %arg1: i32, %arg2: i32) -> (i32, i32) {
    %c0_i32 = arith.constant 0 : i32
    %c0_i32_0 = arith.constant 0 : i32
    return %c0_i32, %arg1 : i32, i32
  }
  func.func @transform_3(%arg0: i32, %arg1: i32, %arg2: i32) -> (i32, i32) {
    %c0_i32 = arith.constant 0 : i32
    return %arg0, %arg1 : i32, i32
  }
}

</mosaic_0001>

<llo_original>
// kernel: attention_forward.3
$region0: #{attention_forward.3}
  #allocation0 [shape = 'u32[]', space=smem, size = 0x4, offset = 0x4, fixed_abs, tag = 'smem constant byte address 0x4 - core index']
  #allocation1 [shape = 'u32[144,128]{1,0:T(1,128)}', space=vmem, size = 0x12000, scoped, tag = 'internal scratch']
  %s0 = inlined_call_operand.vmem [shape: bf16[24,128], index: 0, kind: input, shape index: {}]
  %s1 = inlined_call_operand.vmem [shape: bf16[128,128], index: 1, kind: input, shape index: {}]
  %s2 = inlined_call_operand.vmem [shape: f32[1,128], index: 2, kind: input, shape index: {}]
  %s3 = inlined_call_operand.vmem [shape: bf16[24,128], index: 3, kind: output, shape index: {}]
  %s4 = sld [smem:[#allocation0]]
  $region22: #{attention_forward.3} parent=0
    _
  %s6 = ssub.s32 1, %s4
  %s7 = scalar_select 0, %s6, %s4
  // Predicated region
  $region2: #{attention_forward.3} parent=0 // pred_check
    _
  $region3: #{attention_forward.3} parent=0 // pred_check_branch
    %9 = sbr.rel (0) target = $region5
  $region4: #{attention_forward.3} parent=0 // pred_region
    _
  $region5: #{attention_forward.3} parent=0 // pred_fallthru
    _
  // Predicated region
  $region6: #{attention_forward.3} parent=0 // pred_check
    _
  $region7: #{attention_forward.3} parent=0 // pred_check_branch
    %11 = sbr.rel (0) target = $region9
  $region8: #{attention_forward.3} parent=0 // pred_region
    _
  $region9: #{attention_forward.3} parent=0 // pred_fallthru
    _
  // Predicated region
  $region10: #{attention_forward.3} parent=0 // pred_check
    _
  $region11: #{attention_forward.3} parent=0 // pred_check_branch
    %13 = sbr.rel (0) target = $region13
  $region12: #{attention_forward.3} parent=0 // pred_region
    _
  $region13: #{attention_forward.3} parent=0 // pred_fallthru
    _
  %v15 = vld [vmem:[%s0] sm:$0xf]
  %v16 = vld [vmem:[%s0 + $0x4] sm:$0xf]
  %v17 = vld [vmem:[%s0 + $0x8] sm:$0xf]
  %v18 = vld [vmem:[%s1] sm:$0xf]
  %v19 = vld [vmem:[%s1 + $0x4] sm:$0xf]
  %v20 = vld [vmem:[%s1 + $0x8] sm:$0xf]
  %v21 = vld [vmem:[%s1 + $0xc] sm:$0xf]
  %v22 = vld [vmem:[%s1 + $0x10] sm:$0xf]
  %v23 = vld [vmem:[%s1 + $0x14] sm:$0xf]
  %v24 = vld [vmem:[%s1 + $0x18] sm:$0xf]
  %v25 = vld [vmem:[%s1 + $0x1c] sm:$0xf]
  %v26 = vld [vmem:[%s1 + $0x20] sm:$0xf]
  %v27 = vld [vmem:[%s1 + $0x24] sm:$0xf]
  %v28 = vld [vmem:[%s1 + $0x28] sm:$0xf]
  %v29 = vld [vmem:[%s1 + $0x2c] sm:$0xf]
  %v30 = vld [vmem:[%s1 + $0x30] sm:$0xf]
  %v31 = vld [vmem:[%s1 + $0x34] sm:$0xf]
  %v32 = vld [vmem:[%s1 + $0x38] sm:$0xf]
  %v33 = vld [vmem:[%s1 + $0x3c] sm:$0xf]
  %v34 = vld [vmem:[%s2] sm:$0x1]
  %v36 = vlaneseq
  %v37 = vshrl.u32 %v36, 7
  %v38 = vsub.s32 0, %v37
  %v39 = vrot.slane %v34, %v38
  %v44 = vunpack.c.l.b16 %v15
  %v45 = vunpack.c.l.b16 %v16
  %v46 = vunpack.c.l.b16 %v17
  %v47 = vpack.c.b16 %v45, %v44
  %v48 = vpack.c.b16 %v46, %v46
  %v67 = vunpack.c.l.b16 %v18
  %v68 = vunpack.c.l.b16 %v19
  %v69 = vunpack.c.l.b16 %v20
  %v70 = vunpack.c.l.b16 %v21
  %v71 = vunpack.c.l.b16 %v22
  %v72 = vunpack.c.l.b16 %v23
  %v73 = vunpack.c.l.b16 %v24
  %v74 = vunpack.c.l.b16 %v25
  %v75 = vunpack.c.l.b16 %v26
  %v76 = vunpack.c.l.b16 %v27
  %v77 = vunpack.c.l.b16 %v28
  %v78 = vunpack.c.l.b16 %v29
  %v79 = vunpack.c.l.b16 %v30
  %v80 = vunpack.c.l.b16 %v31
  %v81 = vunpack.c.l.b16 %v32
  %v82 = vunpack.c.l.b16 %v33
  %v83 = vpack.c.b16 %v68, %v67
  %v84 = vpack.c.b16 %v70, %v69
  %v85 = vpack.c.b16 %v72, %v71
  %v86 = vpack.c.b16 %v74, %v73
  %v87 = vpack.c.b16 %v76, %v75
  %v88 = vpack.c.b16 %v78, %v77
  %v89 = vpack.c.b16 %v80, %v79
  %v90 = vpack.c.b16 %v82, %v81
  %99 = vmatprep.subr.bf16.mxu0 0
  %100 = vmatpush1.bf16.msra.mxu0 %v83
  %101 = vmatprep.subr.bf16.mxu0 0
  %102 = vmatpush1.bf16.msra.mxu0 %v84
  %103 = vmatprep.subr.bf16.mxu0 0
  %104 = vmatpush1.bf16.msra.mxu0 %v85
  %105 = vmatprep.subr.bf16.mxu0 0
  %106 = vmatpush1.bf16.msra.mxu0 %v86
  %107 = vmatprep.subr.bf16.mxu0 0
  %108 = vmatpush1.bf16.msra.mxu0 %v87
  %109 = vmatprep.subr.bf16.mxu0 0
  %110 = vmatpush1.bf16.msra.mxu0 %v88
  %111 = vmatprep.subr.bf16.mxu0 0
  %112 = vmatpush1.bf16.msra.mxu0 %v89
  %113 = vmatprep.subr.bf16.mxu0 0
  %114 = vmatpush1.bf16.msra.mxu0 %v90
  %115 = vmatprep.subr.bf16.mxu0 0
  %116 = vmatpush1.bf16.msra.mxu0 0
  %117 = vmatprep.subr.bf16.mxu0 0
  %118 = vmatpush1.bf16.msra.mxu0 0
  %119 = vmatprep.subr.bf16.mxu0 0
  %120 = vmatpush1.bf16.msra.mxu0 0
  %121 = vmatprep.subr.bf16.mxu0 0
  %122 = vmatpush1.bf16.msra.mxu0 0
  %123 = vmatprep.subr.bf16.mxu0 0
  %124 = vmatpush1.bf16.msra.mxu0 0
  %125 = vmatprep.subr.bf16.mxu0 0
  %126 = vmatpush1.bf16.msra.mxu0 0
  %127 = vmatprep.subr.bf16.mxu0 0
  %128 = vmatpush1.bf16.msra.mxu0 0
  %129 = vmatprep.subr.bf16.mxu0 0
  %130 = vmatpush1.bf16.msra.mxu0 0
  %131 = vmatprep.mubr.bf16.mxu0 0
  %132 = vmatmul.mubr.bf16.gmra.mrb[0].mxu0 %v47
  %v133 = vpop.f32.mrb[0].mxu0
  %v134 = vadd.f32 %v39, %v133
  %v135 = vpop.f32.mrb[0].mxu0
  %v136 = vpop.f32.mrb[0].mxu0
  %v137 = vadd.f32 %v39, %v136
  %v138 = vpop.f32.mrb[0].mxu0
  %139 = vmatprep.mubr.bf16.mxu0 0
  %140 = vmatmul.mubr.bf16.gmra.mrb[0].mxu0 %v48
  %v141 = vpop.f32.mrb[0].mxu0
  %v142 = vadd.f32 %v39, %v141
  %v143 = vpop.f32.mrb[0].mxu0
  %v144 = vpop.f32.mrb[0].mxu0
  %v145 = vpop.f32.mrb[0].mxu0
  %146 = vdwg.mxu0
  %v147 = vpack.c.bf16 %v137, %v134
  %v148 = vpack.c.bf16 %v142, %v142
  %v151 = vunpack.c.l.b16 %v147
  %v152 = vunpack.c.h.b16 %v147
  %v153 = vunpack.c.l.b16 %v148
  %v154 = vpack.c.b16 %v151, %v151
  %v155 = vpack.c.b16 %v152, %v152
  %v156 = vpack.c.b16 %v153, %v153
  %160 = vst [vmem:[%s3] sm:$0xf] %v154
  %161 = vst [vmem:[%s3 + $0x4] sm:$0xf] %v155
  %162 = vst [vmem:[%s3 + $0x8] sm:$0xf] %v156
  // Predicated region
  $region14: #{attention_forward.3} parent=0 // pred_check
    _
  $region15: #{attention_forward.3} parent=0 // pred_check_branch
    %164 = sbr.rel (0) target = $region17
  $region16: #{attention_forward.3} parent=0 // pred_region
    _
  $region17: #{attention_forward.3} parent=0 // pred_fallthru
    _
  // Predicated region
  $region18: #{attention_forward.3} parent=0 // pred_check
    _
  $region19: #{attention_forward.3} parent=0 // pred_check_branch
    %166 = sbr.rel (0) target = $region21
  $region20: #{attention_forward.3} parent=0 // pred_region
    _
  $region21: #{attention_forward.3} parent=0 // pred_fallthru
    _

// kernel: attention_forward.5
$region0: #{attention_forward.5}
  #allocation0 [shape = 'u32[]', space=smem, size = 0x4, offset = 0x4, fixed_abs, tag = 'smem constant byte address 0x4 - core index']
  #allocation1 [shape = 'u32[144,128]{1,0:T(1,128)}', space=vmem, size = 0x12000, scoped, tag = 'internal scratch']
  %s0 = inlined_call_operand.vmem [shape: bf16[24,128], index: 0, kind: input, shape index: {}]
  %s1 = inlined_call_operand.vmem [shape: bf16[128,128], index: 1, kind: input, shape index: {}]
  %s2 = inlined_call_operand.vmem [shape: f32[1,128], index: 2, kind: input, shape index: {}]
  %s3 = inlined_call_operand.vmem [shape: f32[24,128], index: 3, kind: output, shape index: {}]
  %s4 = sld [smem:[#allocation0]]
  $region22: #{attention_forward.5} parent=0
    _
  %s6 = ssub.s32 1, %s4
  %s7 = scalar_select 0, %s6, %s4
  // Predicated region
  $region2: #{attention_forward.5} parent=0 // pred_check
    _
  $region3: #{attention_forward.5} parent=0 // pred_check_branch
    %9 = sbr.rel (0) target = $region5
  $region4: #{attention_forward.5} parent=0 // pred_region
    _
  $region5: #{attention_forward.5} parent=0 // pred_fallthru
    _
  // Predicated region
  $region6: #{attention_forward.5} parent=0 // pred_check
    _
  $region7: #{attention_forward.5} parent=0 // pred_check_branch
    %11 = sbr.rel (0) target = $region9
  $region8: #{attention_forward.5} parent=0 // pred_region
    _
  $region9: #{attention_forward.5} parent=0 // pred_fallthru
    _
  // Predicated region
  $region10: #{attention_forward.5} parent=0 // pred_check
    _
  $region11: #{attention_forward.5} parent=0 // pred_check_branch
    %13 = sbr.rel (0) target = $region13
  $region12: #{attention_forward.5} parent=0 // pred_region
    _
  $region13: #{attention_forward.5} parent=0 // pred_fallthru
    _
  %v15 = vld [vmem:[%s0] sm:$0xf]
  %v16 = vld [vmem:[%s0 + $0x4] sm:$0xf]
  %v17 = vld [vmem:[%s0 + $0x8] sm:$0xf]
  %v18 = vld [vmem:[%s1] sm:$0xf]
  %v19 = vld [vmem:[%s1 + $0x4] sm:$0xf]
  %v20 = vld [vmem:[%s1 + $0x8] sm:$0xf]
  %v21 = vld [vmem:[%s1 + $0xc] sm:$0xf]
  %v22 = vld [vmem:[%s1 + $0x10] sm:$0xf]
  %v23 = vld [vmem:[%s1 + $0x14] sm:$0xf]
  %v24 = vld [vmem:[%s1 + $0x18] sm:$0xf]
  %v25 = vld [vmem:[%s1 + $0x1c] sm:$0xf]
  %v26 = vld [vmem:[%s1 + $0x20] sm:$0xf]
  %v27 = vld [vmem:[%s1 + $0x24] sm:$0xf]
  %v28 = vld [vmem:[%s1 + $0x28] sm:$0xf]
  %v29 = vld [vmem:[%s1 + $0x2c] sm:$0xf]
  %v30 = vld [vmem:[%s1 + $0x30] sm:$0xf]
  %v31 = vld [vmem:[%s1 + $0x34] sm:$0xf]
  %v32 = vld [vmem:[%s1 + $0x38] sm:$0xf]
  %v33 = vld [vmem:[%s1 + $0x3c] sm:$0xf]
  %v34 = vld [vmem:[%s2] sm:$0x1]
  %v36 = vlaneseq
  %v37 = vshrl.u32 %v36, 7
  %v38 = vsub.s32 0, %v37
  %v39 = vrot.slane %v34, %v38
  %v44 = vunpack.c.l.b16 %v15
  %v45 = vunpack.c.l.b16 %v16
  %v46 = vunpack.c.l.b16 %v17
  %v47 = vpack.c.b16 %v45, %v44
  %v48 = vpack.c.b16 %v46, %v46
  %v67 = vunpack.c.l.b16 %v18
  %v68 = vunpack.c.l.b16 %v19
  %v69 = vunpack.c.l.b16 %v20
  %v70 = vunpack.c.l.b16 %v21
  %v71 = vunpack.c.l.b16 %v22
  %v72 = vunpack.c.l.b16 %v23
  %v73 = vunpack.c.l.b16 %v24
  %v74 = vunpack.c.l.b16 %v25
  %v75 = vunpack.c.l.b16 %v26
  %v76 = vunpack.c.l.b16 %v27
  %v77 = vunpack.c.l.b16 %v28
  %v78 = vunpack.c.l.b16 %v29
  %v79 = vunpack.c.l.b16 %v30
  %v80 = vunpack.c.l.b16 %v31
  %v81 = vunpack.c.l.b16 %v32
  %v82 = vunpack.c.l.b16 %v33
  %v83 = vpack.c.b16 %v68, %v67
  %v84 = vpack.c.b16 %v70, %v69
  %v85 = vpack.c.b16 %v72, %v71
  %v86 = vpack.c.b16 %v74, %v73
  %v87 = vpack.c.b16 %v76, %v75
  %v88 = vpack.c.b16 %v78, %v77
  %v89 = vpack.c.b16 %v80, %v79
  %v90 = vpack.c.b16 %v82, %v81
  %99 = vmatprep.subr.bf16.mxu0 0
  %100 = vmatpush1.bf16.msra.mxu0 %v83
  %101 = vmatprep.subr.bf16.mxu0 0
  %102 = vmatpush1.bf16.msra.mxu0 %v84
  %103 = vmatprep.subr.bf16.mxu0 0
  %104 = vmatpush1.bf16.msra.mxu0 %v85
  %105 = vmatprep.subr.bf16.mxu0 0
  %106 = vmatpush1.bf16.msra.mxu0 %v86
  %107 = vmatprep.subr.bf16.mxu0 0
  %108 = vmatpush1.bf16.msra.mxu0 %v87
  %109 = vmatprep.subr.bf16.mxu0 0
  %110 = vmatpush1.bf16.msra.mxu0 %v88
  %111 = vmatprep.subr.bf16.mxu0 0
  %112 = vmatpush1.bf16.msra.mxu0 %v89
  %113 = vmatprep.subr.bf16.mxu0 0
  %114 = vmatpush1.bf16.msra.mxu0 %v90
  %115 = vmatprep.subr.bf16.mxu0 0
  %116 = vmatpush1.bf16.msra.mxu0 0
  %117 = vmatprep.subr.bf16.mxu0 0
  %118 = vmatpush1.bf16.msra.mxu0 0
  %119 = vmatprep.subr.bf16.mxu0 0
  %120 = vmatpush1.bf16.msra.mxu0 0
  %121 = vmatprep.subr.bf16.mxu0 0
  %122 = vmatpush1.bf16.msra.mxu0 0
  %123 = vmatprep.subr.bf16.mxu0 0
  %124 = vmatpush1.bf16.msra.mxu0 0
  %125 = vmatprep.subr.bf16.mxu0 0
  %126 = vmatpush1.bf16.msra.mxu0 0
  %127 = vmatprep.subr.bf16.mxu0 0
  %128 = vmatpush1.bf16.msra.mxu0 0
  %129 = vmatprep.subr.bf16.mxu0 0
  %130 = vmatpush1.bf16.msra.mxu0 0
  %131 = vmatprep.mubr.bf16.mxu0 0
  %132 = vmatmul.mubr.bf16.gmra.mrb[0].mxu0 %v47
  %v133 = vpop.f32.mrb[0].mxu0
  %v134 = vadd.f32 %v39, %v133
  %v135 = vpop.f32.mrb[0].mxu0
  %v136 = vpop.f32.mrb[0].mxu0
  %v137 = vadd.f32 %v39, %v136
  %v138 = vpop.f32.mrb[0].mxu0
  %139 = vmatprep.mubr.bf16.mxu0 0
  %140 = vmatmul.mubr.bf16.gmra.mrb[0].mxu0 %v48
  %v141 = vpop.f32.mrb[0].mxu0
  %v142 = vadd.f32 %v39, %v141
  %v143 = vpop.f32.mrb[0].mxu0
  %v144 = vpop.f32.mrb[0].mxu0
  %v145 = vpop.f32.mrb[0].mxu0
  %146 = vdwg.mxu0
  %147 = vst [vmem:[%s3] sm:$0xff] %v134
  %148 = vst [vmem:[%s3 + $0x8] sm:$0xff] %v137
  %149 = vst [vmem:[%s3 + $0x10] sm:$0xff] %v142
  // Predicated region
  $region14: #{attention_forward.5} parent=0 // pred_check
    _
  $region15: #{attention_forward.5} parent=0 // pred_check_branch
    %151 = sbr.rel (0) target = $region17
  $region16: #{attention_forward.5} parent=0 // pred_region
    _
  $region17: #{attention_forward.5} parent=0 // pred_fallthru
    _
  // Predicated region
  $region18: #{attention_forward.5} parent=0 // pred_check
    _
  $region19: #{attention_forward.5} parent=0 // pred_check_branch
    %153 = sbr.rel (0) target = $region21
  $region20: #{attention_forward.5} parent=0 // pred_region
    _
  $region21: #{attention_forward.5} parent=0 // pred_fallthru
    _

// kernel: attention_forward.4
$region0: #{attention_forward.4}
  #allocation0 [shape = 'u32[]', space=smem, size = 0x4, offset = 0x4, fixed_abs, tag = 'smem constant byte address 0x4 - core index']
  #allocation1 [shape = 'u32[144,128]{1,0:T(1,128)}', space=vmem, size = 0x12000, scoped, tag = 'internal scratch']
  #allocation2 [shape = 'f32[16,1]{1,0:T(8,128)}', space=vmem, size = 0x2000, scoped, tag = 'scratch operand']
  #allocation3 [shape = 'f32[16,1]{1,0:T(8,128)}', space=vmem, size = 0x2000, scoped, tag = 'scratch operand']
  #allocation4 [shape = 'f32[16,4]{1,0:T(8,128)}', space=vmem, size = 0x2000, scoped, tag = 'scratch operand']
  %s0 = inlined_call_operand.vmem [shape: bf16[16,16,4], index: 0, kind: input, shape index: {}]
  %s1 = inlined_call_operand.vmem [shape: bf16[16,16,4], index: 1, kind: input, shape index: {}]
  %s2 = inlined_call_operand.vmem [shape: bf16[16,16,4], index: 2, kind: input, shape index: {}]
  %s3 = inlined_call_operand.vmem [shape: bf16[16,16,4], index: 3, kind: output, shape index: {}]
  %s4 = sld [smem:[#allocation0]]
  $region53: #{attention_forward.4} parent=0
    _
  %s6 = ssub.s32 1, %s4
  %s7 = scalar_select 0, %s6, %s4
  loop: start=0, step=1, limit=18
  $region2: #{attention_forward.4} parent=0 // loop_pre_header
    _
  $region3: #{attention_forward.4} parent=0 // loop_header
    %s9 = sphi 0, %s13
    %p10 = scmp.ge.s32.totalorder %s9, 18
    %s16 = sphi 0, %s35
    %s17 = sphi 0, %s31
    %s18 = sphi 0, %s27
    %s19 = sphi 0, %s16
    %s20 = sphi 0, %s17
    %s21 = sphi 0, %s18
    %s22 = sphi 0, %s19
    %s23 = sphi 0, %s20
    %s24 = sphi 0, %s21
    %s40 = sphi 0, %s42
    %s43 = sphi 0, %s40
    %s44 = sphi 0, %s43
    %s60 = sphi 0, %s44
    %s68 = sphi 0, %s70
    %s71 = sphi 0, %s68
    %s72 = sphi 0, %s71
    %s88 = sphi 0, %s72
    %s96 = sphi 0, %s98
    %s99 = sphi 0, %s96
    %s100 = sphi 0, %s99
    %s116 = sphi 0, %s100
    %s124 = sphi 0, %s126
    %s127 = sphi 0, %s124
    %s128 = sphi 0, %s127
    %s144 = sphi 0, %s128
  $region4: #{attention_forward.4} parent=0 // loop_header_branch
    %12 = sbr.rel (%p10) target = $region8
  $region5: #{attention_forward.4} parent=0 // loop_body
    %s14 = ssub.s32 %s9, 1
    %s15 = ssub.s32 %s9, 2
    %s25 = sadd.s32 1, %s18
    %p26 = scmp.ge.s32.totalorder %s25, 1
    %s27 = scalar_select %p26, 0, %s25
    %s28 = sadd.s32 1, %s17
    %s29 = scalar_select %p26, %s28, %s17
    %p30 = scmp.ge.s32.totalorder %s29, 1
    %s31 = scalar_select %p30, 0, %s29
    %s32 = sadd.s32 1, %s16
    %s33 = scalar_select %p30, %s32, %s16
    %p34 = scmp.ge.s32.totalorder %s33, 16
    %s35 = scalar_select %p34, 0, %s33
    %s36 = ssub.s32 %s16, %s35
    %s37 = ssub.s32 %s17, %s31
    %s38 = sor.u32 %s36, %s37
    %p39 = scmp.eq.s32.totalorder %s38, 0
    %s41 = sadd.s32 %s40, 1
    %s42 = scalar_select %p39, %s40, %s41
    %p45 = pneg %p39
    %p46 = scmp.eq.s32.totalorder %s9, 15
    %p47 = por %p45, %p46
    %p48 = scmp.ne.s32.totalorder %s40, %s43
    %p49 = scmp.eq.s32.totalorder %s9, 0
    %p50 = por %p48, %p49
    %p51 = scmp.ne.s32.totalorder %s40, %s43
    %p52 = scmp.eq.s32.totalorder %s14, 15
    %p53 = por %p51, %p52
    %p54 = scmp.ne.s32.totalorder %s43, %s44
    %p55 = scmp.eq.s32.totalorder %s14, 0
    %p56 = por %p54, %p55
    %p57 = scmp.ne.s32.totalorder %s43, %s44
    %p58 = scmp.eq.s32.totalorder %s15, 15
    %p59 = por %p57, %p58
    %p61 = scmp.ne.s32.totalorder %s44, %s60
    %p62 = scmp.eq.s32.totalorder %s15, 0
    %p63 = por %p61, %p62
    %s64 = ssub.s32 %s16, %s35
    %s65 = ssub.s32 %s18, %s27
    %s66 = sor.u32 %s64, %s65
    %p67 = scmp.eq.s32.totalorder %s66, 0
    %s69 = sadd.s32 %s68, 1
    %s70 = scalar_select %p67, %s68, %s69
    %p73 = pneg %p67
    %p74 = scmp.eq.s32.totalorder %s9, 15
    %p75 = por %p73, %p74
    %p76 = scmp.ne.s32.totalorder %s68, %s71
    %p77 = scmp.eq.s32.totalorder %s9, 0
    %p78 = por %p76, %p77
    %p79 = scmp.ne.s32.totalorder %s68, %s71
    %p80 = scmp.eq.s32.totalorder %s14, 15
    %p81 = por %p79, %p80
    %p82 = scmp.ne.s32.totalorder %s71, %s72
    %p83 = scmp.eq.s32.totalorder %s14, 0
    %p84 = por %p82, %p83
    %p85 = scmp.ne.s32.totalorder %s71, %s72
    %p86 = scmp.eq.s32.totalorder %s15, 15
    %p87 = por %p85, %p86
    %p89 = scmp.ne.s32.totalorder %s72, %s88
    %p90 = scmp.eq.s32.totalorder %s15, 0
    %p91 = por %p89, %p90
    %s92 = ssub.s32 %s16, %s35
    %s93 = ssub.s32 %s18, %s27
    %s94 = sor.u32 %s92, %s93
    %p95 = scmp.eq.s32.totalorder %s94, 0
    %s97 = sadd.s32 %s96, 1
    %s98 = scalar_select %p95, %s96, %s97
    %p101 = pneg %p95
    %p102 = scmp.eq.s32.totalorder %s9, 15
    %p103 = por %p101, %p102
    %p104 = scmp.ne.s32.totalorder %s96, %s99
    %p105 = scmp.eq.s32.totalorder %s9, 0
    %p106 = por %p104, %p105
    %p107 = scmp.ne.s32.totalorder %s96, %s99
    %p108 = scmp.eq.s32.totalorder %s14, 15
    %p109 = por %p107, %p108
    %p110 = scmp.ne.s32.totalorder %s99, %s100
    %p111 = scmp.eq.s32.totalorder %s14, 0
    %p112 = por %p110, %p111
    %p113 = scmp.ne.s32.totalorder %s99, %s100
    %p114 = scmp.eq.s32.totalorder %s15, 15
    %p115 = por %p113, %p114
    %p117 = scmp.ne.s32.totalorder %s100, %s116
    %p118 = scmp.eq.s32.totalorder %s15, 0
    %p119 = por %p117, %p118
    %s120 = ssub.s32 %s16, %s35
    %s121 = ssub.s32 %s17, %s31
    %s122 = sor.u32 %s120, %s121
    %p123 = scmp.eq.s32.totalorder %s122, 0
    %s125 = sadd.s32 %s124, 1
    %s126 = scalar_select %p123, %s124, %s125
    %p129 = pneg %p123
    %p130 = scmp.eq.s32.totalorder %s9, 15
    %p131 = por %p129, %p130
    %p132 = scmp.ne.s32.totalorder %s124, %s127
    %p133 = scmp.eq.s32.totalorder %s9, 0
    %p134 = por %p132, %p133
    %p135 = scmp.ne.s32.totalorder %s124, %s127
    %p136 = scmp.eq.s32.totalorder %s14, 15
    %p137 = por %p135, %p136
    %p138 = scmp.ne.s32.totalorder %s127, %s128
    %p139 = scmp.eq.s32.totalorder %s14, 0
    %p140 = por %p138, %p139
    %p141 = scmp.ne.s32.totalorder %s127, %s128
    %p142 = scmp.eq.s32.totalorder %s15, 15
    %p143 = por %p141, %p142
    %p145 = scmp.ne.s32.totalorder %s128, %s144
    %p146 = scmp.eq.s32.totalorder %s15, 0
    %p147 = por %p145, %p146
    %p148 = scmp.le.s32.totalorder 1, %s9
    %p149 = scmp.lt.s32.totalorder %s9, 17
    %p150 = pnand %p148, %p149
    %p151 = pneg %p150
    // Predicated region
    $region9: #{attention_forward.4} parent=5 // pred_check
      _
    $region10: #{attention_forward.4} parent=5 // pred_check_branch
      %153 = sbr.rel (%p150) target = $region12
    $region11: #{attention_forward.4} parent=5 // pred_region
      %s154 = ssub.s32 %s9, 1
    $region12: #{attention_forward.4} parent=5 // pred_fallthru
      _
    %p155 = scmp.lt.s32.totalorder %s9, 16
    // Predicated region
    $region13: #{attention_forward.4} parent=5 // pred_check
      %p156 = pneg %p155
    $region14: #{attention_forward.4} parent=5 // pred_check_branch
      %158 = sbr.rel (%p156) target = $region16
    $region15: #{attention_forward.4} parent=5 // pred_region
      // Predicated region
      $region17: #{attention_forward.4} parent=15 // pred_check
        %p159 = pneg %p50
      $region18: #{attention_forward.4} parent=15 // pred_check_branch
        %161 = sbr.rel (%p159) target = $region20
      $region19: #{attention_forward.4} parent=15 // pred_region
        %s162 = smul.u32 2, %s17
        %p163 = scmp.lt.s32.totalorder %s16, 15
        %s164 = scalar_select %p163, %s16, 15
        %p165 = scmp.lt.s32.totalorder %s162, 1
        %s166 = scalar_select %p165, %s162, 1
        %s167 = smul.addr %s164, 2
        %s168 = sadd.s32 %s166, %s167
        %s169 = smul.addr %s168, 4
        %s170 = scalar_lea.vmem %s0, %s169
        %s171 = smul.u32 2, %s17
      $region20: #{attention_forward.4} parent=15 // pred_fallthru
        _
      // Predicated region
      $region21: #{attention_forward.4} parent=15 // pred_check
        %p172 = pneg %p78
      $region22: #{attention_forward.4} parent=15 // pred_check_branch
        %174 = sbr.rel (%p172) target = $region24
      $region23: #{attention_forward.4} parent=15 // pred_region
        %s175 = smul.u32 2, %s18
        %p176 = scmp.lt.s32.totalorder %s16, 15
        %s177 = scalar_select %p176, %s16, 15
        %p178 = scmp.lt.s32.totalorder %s175, 1
        %s179 = scalar_select %p178, %s175, 1
        %s180 = smul.addr %s177, 2
        %s181 = sadd.s32 %s179, %s180
        %s182 = smul.addr %s181, 4
        %s183 = scalar_lea.vmem %s1, %s182
        %s184 = smul.u32 2, %s18
      $region24: #{attention_forward.4} parent=15 // pred_fallthru
        _
      // Predicated region
      $region25: #{attention_forward.4} parent=15 // pred_check
        %p185 = pneg %p106
      $region26: #{attention_forward.4} parent=15 // pred_check_branch
        %187 = sbr.rel (%p185) target = $region28
      $region27: #{attention_forward.4} parent=15 // pred_region
        %s188 = smul.u32 2, %s18
        %p189 = scmp.lt.s32.totalorder %s16, 15
        %s190 = scalar_select %p189, %s16, 15
        %p191 = scmp.lt.s32.totalorder %s188, 1
        %s192 = scalar_select %p191, %s188, 1
        %s193 = smul.addr %s190, 2
        %s194 = sadd.s32 %s192, %s193
        %s195 = smul.addr %s194, 4
        %s196 = scalar_lea.vmem %s2, %s195
        %s197 = smul.u32 2, %s18
      $region28: #{attention_forward.4} parent=15 // pred_fallthru
        _
    $region16: #{attention_forward.4} parent=5 // pred_fallthru
      _
    %p198 = scmp.le.s32.totalorder 1, %s9
    %p199 = scmp.lt.s32.totalorder %s9, 17
    %p200 = pnand %p198, %p199
    %p201 = pneg %p200
    // Predicated region
    $region29: #{attention_forward.4} parent=5 // pred_check
      _
    $region30: #{attention_forward.4} parent=5 // pred_check_branch
      %203 = sbr.rel (%p200) target = $region32
    $region31: #{attention_forward.4} parent=5 // pred_region
      %s204 = ssub.s32 %s9, 1
      %s205 = smul.u32 2, %s20
      %p206 = scmp.lt.s32.totalorder %s19, 15
      %s207 = scalar_select %p206, %s19, 15
      %p208 = scmp.lt.s32.totalorder %s205, 1
      %s209 = scalar_select %p208, %s205, 1
      %s210 = smul.addr %s207, 2
      %s211 = sadd.s32 %s209, %s210
      %s212 = smul.addr %s211, 4
      %s213 = scalar_lea.vmem %s0, %s212
      %p214 = pneg %p56
      %p215 = pneg %p53
      %s216 = smul.u32 2, %s21
      %p217 = scmp.lt.s32.totalorder %s19, 15
      %s218 = scalar_select %p217, %s19, 15
      %p219 = scmp.lt.s32.totalorder %s216, 1
      %s220 = scalar_select %p219, %s216, 1
      %s221 = smul.addr %s218, 2
      %s222 = sadd.s32 %s220, %s221
      %s223 = smul.addr %s222, 4
      %s224 = scalar_lea.vmem %s1, %s223
      %p225 = pneg %p84
      %p226 = pneg %p81
      %s227 = smul.u32 2, %s21
      %p228 = scmp.lt.s32.totalorder %s19, 15
      %s229 = scalar_select %p228, %s19, 15
      %p230 = scmp.lt.s32.totalorder %s227, 1
      %s231 = scalar_select %p230, %s227, 1
      %s232 = smul.addr %s229, 2
      %s233 = sadd.s32 %s231, %s232
      %s234 = smul.addr %s233, 4
      %s235 = scalar_lea.vmem %s2, %s234
      %p236 = pneg %p112
      %p237 = pneg %p109
      %p238 = pneg %p140
      %p239 = pneg %p137
      %s240 = smul.u32 2, %s20
      %p241 = scmp.lt.s32.totalorder %s19, 15
      %s242 = scalar_select %p241, %s19, 15
      %p243 = scmp.lt.s32.totalorder %s240, 1
      %s244 = scalar_select %p243, %s240, 1
      %s245 = smul.addr %s242, 2
      %s246 = sadd.s32 %s244, %s245
      %s247 = smul.addr %s246, 4
      %s248 = scalar_lea.vmem %s3, %s247
      %s249 = smul.u32 2, %s20
      %p250 = scmp.lt.s32.totalorder %s19, 15
      %s251 = scalar_select %p250, %s19, 15
      %p252 = scmp.lt.s32.totalorder %s249, 1
      %s253 = scalar_select %p252, %s249, 1
      %s254 = smul.addr %s251, 2
      %s255 = sadd.s32 %s253, %s254
      %s256 = smul.addr %s255, 4
      %s257 = scalar_lea.vmem %s0, %s256
      %s258 = smul.u32 2, %s20
      %s259 = smul.u32 2, %s21
      %p260 = scmp.lt.s32.totalorder %s19, 15
      %s261 = scalar_select %p260, %s19, 15
      %p262 = scmp.lt.s32.totalorder %s259, 1
      %s263 = scalar_select %p262, %s259, 1
      %s264 = smul.addr %s261, 2
      %s265 = sadd.s32 %s263, %s264
      %s266 = smul.addr %s265, 4
      %s267 = scalar_lea.vmem %s1, %s266
      %s268 = smul.u32 2, %s21
      %s269 = smul.u32 2, %s21
      %p270 = scmp.lt.s32.totalorder %s19, 15
      %s271 = scalar_select %p270, %s19, 15
      %p272 = scmp.lt.s32.totalorder %s269, 1
      %s273 = scalar_select %p272, %s269, 1
      %s274 = smul.addr %s271, 2
      %s275 = sadd.s32 %s273, %s274
      %s276 = smul.addr %s275, 4
      %s277 = scalar_lea.vmem %s2, %s276
      %s278 = smul.u32 2, %s21
      %s279 = smul.u32 2, %s20
      %p280 = scmp.lt.s32.totalorder %s19, 15
      %s281 = scalar_select %p280, %s19, 15
      %p282 = scmp.lt.s32.totalorder %s279, 1
      %s283 = scalar_select %p282, %s279, 1
      %s284 = smul.addr %s281, 2
      %s285 = sadd.s32 %s283, %s284
      %s286 = smul.addr %s285, 4
      %s287 = scalar_lea.vmem %s3, %s286
      %s288 = smul.u32 2, %s20
      %p291 = scmp.eq.s32.totalorder %s21, 0
      // Predicated region
      $region33: #{attention_forward.4} parent=31 // pred_check
        %p292 = pneg %p291
      $region34: #{attention_forward.4} parent=31 // pred_check_branch
        %294 = sbr.rel (%p292) target = $region36
      $region35: #{attention_forward.4} parent=31 // pred_region
        %vm295 = vcmask 7168
        %296 = vst.msk [vmem:[#allocation2] sm:$0xff] %vm295, -inf
        %297 = vst.msk [vmem:[#allocation2 + $0x8] sm:$0xff] %vm295, -inf
        %298 = vst.msk [vmem:[#allocation3] sm:$0xff] %vm295, 0.0
        %299 = vst.msk [vmem:[#allocation3 + $0x8] sm:$0xff] %vm295, 0.0
        %vm300 = vcmask 31744
        %301 = vst.msk [vmem:[#allocation4] sm:$0xff] %vm300, 0.0
        %302 = vst.msk [vmem:[#allocation4 + $0x8] sm:$0xff] %vm300, 0.0
      $region36: #{attention_forward.4} parent=31 // pred_fallthru
        _
      %v303 = vld [vmem:[%s257] sm:$0xf]
      %v304 = vld [vmem:[%s257 + $0x4] sm:$0xf]
      %v305 = vmul.bf16 %v303, 1056980736
      %v306 = vmul.bf16 %v304, 1056980736
      %v307 = vld [vmem:[%s267] sm:$0xf]
      %v308 = vld [vmem:[%s267 + $0x4] sm:$0xf]
      %v311 = vunpack.c.l.b16 %v305
      %v312 = vunpack.c.l.b16 %v306
      %v313 = vpack.c.b16 %v312, %v311
      %v316 = vunpack.c.l.b16 %v307
      %v317 = vunpack.c.l.b16 %v308
      %v318 = vpack.c.b16 %v317, %v316
      %vm319 = vcmask 31744
      %v321 = vsel %vm319, %v313, 0
      %v324 = vsel %vm319, %v318, 0
      %326 = vmatprep.subr.bf16.mxu0 0
      %327 = vmatpush1.bf16.xpose.msra.mxu0 %v324
      %328 = vmatprep.subr.bf16.mxu0 0
      %329 = vmatpush1.bf16.xpose.msra.mxu0 0
      %330 = vmatprep.subr.bf16.mxu0 0
      %331 = vmatpush1.bf16.xpose.msra.mxu0 0
      %332 = vmatprep.subr.bf16.mxu0 0
      %333 = vmatpush1.bf16.xpose.msra.mxu0 0
      %334 = vmatprep.subr.bf16.mxu0 0
      %335 = vmatpush1.bf16.xpose.msra.mxu0 0
      %336 = vmatprep.subr.bf16.mxu0 0
      %337 = vmatpush1.bf16.xpose.msra.mxu0 0
      %338 = vmatprep.subr.bf16.mxu0 0
      %339 = vmatpush1.bf16.xpose.msra.mxu0 0
      %340 = vmatprep.subr.bf16.mxu0 0
      %341 = vmatpush1.bf16.xpose.msra.mxu0 0
      %342 = vmatprep.subr.bf16.mxu0 0
      %343 = vmatpush1.bf16.xpose.msra.mxu0 0
      %344 = vmatprep.subr.bf16.mxu0 0
      %345 = vmatpush1.bf16.xpose.msra.mxu0 0
      %346 = vmatprep.subr.bf16.mxu0 0
      %347 = vmatpush1.bf16.xpose.msra.mxu0 0
      %348 = vmatprep.subr.bf16.mxu0 0
      %349 = vmatpush1.bf16.xpose.msra.mxu0 0
      %350 = vmatprep.subr.bf16.mxu0 0
      %351 = vmatpush1.bf16.xpose.msra.mxu0 0
      %352 = vmatprep.subr.bf16.mxu0 0
      %353 = vmatpush1.bf16.xpose.msra.mxu0 0
      %354 = vmatprep.subr.bf16.mxu0 0
      %355 = vmatpush1.bf16.xpose.msra.mxu0 0
      %356 = vmatprep.subr.bf16.mxu0 0
      %357 = vmatpush1.bf16.xpose.msra.mxu0 0
      %358 = vmatprep.mubr.bf16.mxu0 0
      %359 = vmatmul.mubr.bf16.gmra.mrb[0].mxu0 %v321
      %v360 = vpop.f32.mrb[0].mxu0
      %v361 = vadd.f32 0.0, %v360
      %v362 = vpop.f32.mrb[0].mxu0
      %v363 = vpop.f32.mrb[0].mxu0
      %v364 = vadd.f32 0.0, %v363
      %v365 = vpop.f32.mrb[0].mxu0
      %366 = vdwg.mxu0
      %s367 = smul.u32 %s21, 16
      %v368 = vlaneseq
      %v369 = vand.u32 %v368, 127
      %v370 = vstv %s367
      %v371 = vadd.s32 %v370, %v369
      %vm372 = vcmp.lt.s32.totalorder %v371, 10
      %v373 = vsel %vm372, %v361, -1e+30
      %v374 = vsel %vm372, %v364, -1e+30
      %v375 = vld [vmem:[#allocation2] sm:$0xff]
      %v376 = vld [vmem:[#allocation2 + $0x8] sm:$0xff]
      %vm377 = vcmask 130048
      %v378 = vsel %vm377, %v373, -inf
      %379 = vmax.xlane.f32.xlu0 %v378
      %v380 = vpop.xlane.xlu0 %379
      %v381 = vsel %vm377, %v374, -inf
      %382 = vmax.xlane.f32.xlu0 %v381
      %v383 = vpop.xlane.xlu0 %382
      %v384 = vmax.f32 %v375, %v380
      %v385 = vmax.f32 %v376, %v383
      %v386 = vsub.f32 %v375, %v384
      %v387 = vsub.f32 %v376, %v385
      %v388 = vmul.f32 %v386, 1.442695
      %v389 = vpow.pop %v388
      %v390 = vmul.f32 %v387, 1.442695
      %v391 = vpow.pop %v390
      %393 = vset.pattern.permute.xlu0 0
      %394 = vperm.xlu0 %393, %v384
      %v395 = vpop.permute.xlu0 %394
      %398 = vset.pattern.permute.xlu0 0
      %399 = vperm.xlu0 %398, %v385
      %v400 = vpop.permute.xlu0 %399
      %v402 = vsub.f32 %v373, %v395
      %v403 = vsub.f32 %v374, %v400
      %v404 = vmul.f32 %v402, 1.442695
      %v405 = vpow.pop %v404
      %v406 = vmul.f32 %v403, 1.442695
      %v407 = vpow.pop %v406
      %v408 = vld [vmem:[#allocation3] sm:$0xff]
      %v409 = vld [vmem:[#allocation3 + $0x8] sm:$0xff]
      %v410 = vmul.f32 %v389, %v408
      %v411 = vmul.f32 %v391, %v409
      %v412 = vsel %vm377, %v405, 0.0
      %413 = vadd.xlane.f32.xlu0 %v412
      %v414 = vpop.xlane.xlu0 %413
      %v415 = vsel %vm377, %v407, 0.0
      %416 = vadd.xlane.f32.xlu0 %v415
      %v417 = vpop.xlane.xlu0 %416
      %v418 = vadd.f32 %v410, %v414
      %v419 = vadd.f32 %v411, %v417
      %vm420 = vcmask 7168
      %421 = vst.msk [vmem:[#allocation3] sm:$0xff] %vm420, %v418
      %422 = vst.msk [vmem:[#allocation3 + $0x8] sm:$0xff] %vm420, %v419
      %v423 = vld [vmem:[#allocation4] sm:$0xff]
      %v424 = vld [vmem:[#allocation4 + $0x8] sm:$0xff]
      %426 = vset.pattern.permute.xlu0 0
      %427 = vperm.xlu0 %426, %v389
      %v428 = vpop.permute.xlu0 %427
      %431 = vset.pattern.permute.xlu0 0
      %432 = vperm.xlu0 %431, %v391
      %v433 = vpop.permute.xlu0 %432
      %v435 = vmul.f32 %v428, %v423
      %v436 = vmul.f32 %v433, %v424
      %v437 = vpack.c.bf16 %v407, %v405
      %v438 = vld [vmem:[%s277] sm:$0xf]
      %v439 = vld [vmem:[%s277 + $0x4] sm:$0xf]
      %v442 = vunpack.c.l.b16 %v438
      %v443 = vunpack.c.l.b16 %v439
      %v444 = vpack.c.b16 %v443, %v442
      %v447 = vsel %vm377, %v437, 0
      %449 = vmatprep.subr.bf16.mxu0 0
      %450 = vmatpush1.bf16.msra.mxu0 %v444
      %451 = vmatprep.subr.bf16.mxu0 0
      %452 = vmatpush1.bf16.msra.mxu0 0
      %453 = vmatprep.subr.bf16.mxu0 0
      %454 = vmatpush1.bf16.msra.mxu0 0
      %455 = vmatprep.subr.bf16.mxu0 0
      %456 = vmatpush1.bf16.msra.mxu0 0
      %457 = vmatprep.subr.bf16.mxu0 0
      %458 = vmatpush1.bf16.msra.mxu0 0
      %459 = vmatprep.subr.bf16.mxu0 0
      %460 = vmatpush1.bf16.msra.mxu0 0
      %461 = vmatprep.subr.bf16.mxu0 0
      %462 = vmatpush1.bf16.msra.mxu0 0
      %463 = vmatprep.subr.bf16.mxu0 0
      %464 = vmatpush1.bf16.msra.mxu0 0
      %465 = vmatprep.subr.bf16.mxu0 0
      %466 = vmatpush1.bf16.msra.mxu0 0
      %467 = vmatprep.subr.bf16.mxu0 0
      %468 = vmatpush1.bf16.msra.mxu0 0
      %469 = vmatprep.subr.bf16.mxu0 0
      %470 = vmatpush1.bf16.msra.mxu0 0
      %471 = vmatprep.subr.bf16.mxu0 0
      %472 = vmatpush1.bf16.msra.mxu0 0
      %473 = vmatprep.subr.bf16.mxu0 0
      %474 = vmatpush1.bf16.msra.mxu0 0
      %475 = vmatprep.subr.bf16.mxu0 0
      %476 = vmatpush1.bf16.msra.mxu0 0
      %477 = vmatprep.subr.bf16.mxu0 0
      %478 = vmatpush1.bf16.msra.mxu0 0
      %479 = vmatprep.subr.bf16.mxu0 0
      %480 = vmatpush1.bf16.msra.mxu0 0
      %481 = vmatprep.mubr.bf16.mxu0 0
      %482 = vmatmul.mubr.bf16.gmra.mrb[0].mxu0 %v447
      %v483 = vpop.f32.mrb[0].mxu0
      %v484 = vadd.f32 0.0, %v483
      %v485 = vpop.f32.mrb[0].mxu0
      %v486 = vpop.f32.mrb[0].mxu0
      %v487 = vadd.f32 0.0, %v486
      %v488 = vpop.f32.mrb[0].mxu0
      %489 = vdwg.mxu0
      %v490 = vadd.f32 %v435, %v484
      %v491 = vadd.f32 %v436, %v487
      %492 = vst.msk [vmem:[#allocation4] sm:$0xff] %vm319, %v490
      %493 = vst.msk [vmem:[#allocation4 + $0x8] sm:$0xff] %vm319, %v491
      %494 = vst.msk [vmem:[#allocation2] sm:$0xff] %vm420, %v384
      %495 = vst.msk [vmem:[#allocation2 + $0x8] sm:$0xff] %vm420, %v385
      // Predicated region
      $region37: #{attention_forward.4} parent=31 // pred_check
        %p496 = pneg %p291
      $region38: #{attention_forward.4} parent=31 // pred_check_branch
        %498 = sbr.rel (%p496) target = $region40
      $region39: #{attention_forward.4} parent=31 // pred_region
        %v499 = vld [vmem:[#allocation4] sm:$0xff]
        %v500 = vld [vmem:[#allocation4 + $0x8] sm:$0xff]
        %v501 = vld [vmem:[#allocation3] sm:$0xff]
        %v502 = vld [vmem:[#allocation3 + $0x8] sm:$0xff]
        %504 = vset.pattern.permute.xlu0 0
        %505 = vperm.xlu0 %504, %v501
        %v506 = vpop.permute.xlu0 %505
        %509 = vset.pattern.permute.xlu0 0
        %510 = vperm.xlu0 %509, %v502
        %v511 = vpop.permute.xlu0 %510
        %v513 = vrcp.pop %v506
        %v514 = vmul.f32 %v499, %v513
        %v515 = vrcp.pop %v511
        %v516 = vmul.f32 %v500, %v515
        %v517 = vpack.c.bf16 %v516, %v514
        %v519 = vunpack.c.l.b16 %v517
        %v520 = vunpack.c.h.b16 %v517
        %v521 = vpack.c.b16 %v519, %v519
        %v522 = vpack.c.b16 %v520, %v520
        %vm525 = vcmask 27648
        %526 = vst.msk [vmem:[%s287] sm:$0xf] %vm525, %v521
        %527 = vst.msk [vmem:[%s287 + $0x4] sm:$0xf] %vm525, %v522
      $region40: #{attention_forward.4} parent=31 // pred_fallthru
        _
      %s528 = smul.u32 2, %s20
      %p529 = scmp.lt.s32.totalorder %s19, 15
      %s530 = scalar_select %p529, %s19, 15
      %p531 = scmp.lt.s32.totalorder %s528, 1
      %s532 = scalar_select %p531, %s528, 1
      %s533 = smul.addr %s530, 2
      %s534 = sadd.s32 %s532, %s533
      %s535 = smul.addr %s534, 4
      %s536 = scalar_lea.vmem %s3, %s535
      // Predicated region
      $region41: #{attention_forward.4} parent=31 // pred_check
        %p537 = pneg %p137
      $region42: #{attention_forward.4} parent=31 // pred_check_branch
        %539 = sbr.rel (%p537) target = $region44
      $region43: #{attention_forward.4} parent=31 // pred_region
        %s540 = smul.u32 2, %s20
      $region44: #{attention_forward.4} parent=31 // pred_fallthru
        _
    $region32: #{attention_forward.4} parent=5 // pred_fallthru
      _
    %p541 = scmp.le.s32.totalorder 2, %s9
    // Predicated region
    $region45: #{attention_forward.4} parent=5 // pred_check
      %p542 = pneg %p541
    $region46: #{attention_forward.4} parent=5 // pred_check_branch
      %544 = sbr.rel (%p542) target = $region48
    $region47: #{attention_forward.4} parent=5 // pred_region
      %s545 = ssub.s32 %s9, 2
      // Predicated region
      $region49: #{attention_forward.4} parent=47 // pred_check
        %p546 = pneg %p143
      $region50: #{attention_forward.4} parent=47 // pred_check_branch
        %548 = sbr.rel (%p546) target = $region52
      $region51: #{attention_forward.4} parent=47 // pred_region
        %s549 = smul.u32 2, %s23
        %p550 = scmp.lt.s32.totalorder %s22, 15
        %s551 = scalar_select %p550, %s22, 15
        %p552 = scmp.lt.s32.totalorder %s549, 1
        %s553 = scalar_select %p552, %s549, 1
        %s554 = smul.addr %s551, 2
        %s555 = sadd.s32 %s553, %s554
        %s556 = smul.addr %s555, 4
        %s557 = scalar_lea.vmem %s3, %s556
      $region52: #{attention_forward.4} parent=47 // pred_fallthru
        _
    $region48: #{attention_forward.4} parent=5 // pred_fallthru
      _
  $region6: #{attention_forward.4} parent=0 // loop_footer
    %s13 = sadd.s32 1, %s9
  $region7: #{attention_forward.4} parent=0 // loop_footer_branch
    %8 = sbr.rel target = $region3
  $region8: #{attention_forward.4} parent=0 // loop_exit
    _

</llo_original>
